<compile_context>
chip_gen: v5e
topology: v5e:2x2
jax: 0.10.0
libtpu: 0.0.40
codegen_flags: <defaults>
</compile_context>

<pallas_src>
import functools

import jax
import jax.numpy as jnp
from jax import lax
from jax.experimental import pallas as pl
from jax.experimental.pallas import tpu as pltpu


def _disc_loss_kernel(u_ref, v_ref, b_ref, y_ref, out_ref,
                      *, inv_batch, half_lambda, batch, tile_rows):
    t = pl.program_id(0)

    u = u_ref[...]          # (TB, D) f32
    v = v_ref[...]          # (TB, D) f32
    b = b_ref[...]          # (TB, 1) f32
    y = y_ref[...]          # (TB, 1) f32

    # score_i = <u_i, v_i> + bias_i
    score = jnp.sum(u * v, axis=-1, keepdims=True) + b                 # (TB, 1)

    # numerically-stable binary_cross_entropy_with_logits (per sample)
    bce = (jnp.maximum(score, 0.0) - score * y
           + jnp.log(1.0 + jnp.exp(-jnp.abs(score))))                  # (TB, 1)

    # mask rows past the true batch (padded zero rows would add log(2) otherwise)
    row = lax.broadcasted_iota(jnp.int32, (tile_rows, 1), 0) + t * tile_rows
    bce = jnp.where(row < batch, bce, 0.0)

    # l2 contributions of this tile's rows; padded rows are all-zero already
    l2_rows = jnp.sum(u * u + v * v, axis=-1, keepdims=True) + b * b   # (TB, 1)

    # per-row contribution: bce/batch + 0.5*lambda_dis*(|u|^2 + |v|^2 + b^2)
    contrib = bce * inv_batch + half_lambda * l2_rows                  # (TB, 1)
    partial = jnp.sum(contrib)

    # lane-dense (1, 128) partial row (unmasked vst); only column 0 is read later
    out_ref[...] = jnp.full((1, 128), partial, dtype=out_ref.dtype)


def discriminator_loss(node_emd, bias_vector, node_ids, neighbor_ids, label,
                       *, lambda_dis, max_rows_per_tile=512):
    """node_emd: (N, D), bias_vector: (N,), node_ids/neighbor_ids: (B,) int,
       label: (B,) -> scalar f32 loss (matches Discriminator.forward)."""
    n_node, emd_size = node_emd.shape
    batch = int(node_ids.shape[0])

    node_ids = node_ids.astype(jnp.int32)
    neighbor_ids = neighbor_ids.astype(jnp.int32)

    table = node_emd.astype(jnp.float32)
    bias = bias_vector.astype(jnp.float32)

    # Hoist gathers to XLA: kernel inputs become dense, contiguous slabs.
    u = jnp.take(table, node_ids, axis=0)                    # (B, D)
    v = jnp.take(table, neighbor_ids, axis=0)                # (B, D)
    b = jnp.take(bias, neighbor_ids, axis=0)[:, None]        # (B, 1)
    y = label.astype(jnp.float32)[:, None]                   # (B, 1)

    # Batch tile: multiple of 8 sublanes, capped at max_rows_per_tile.
    tile_rows = min(int(max_rows_per_tile), ((batch + 7) // 8) * 8)
    tile_rows = max(8, (tile_rows // 8) * 8)
    num_tiles = pl.cdiv(batch, tile_rows)
    pad = num_tiles * tile_rows - batch
    if pad:
        u = jnp.pad(u, ((0, pad), (0, 0)))
        v = jnp.pad(v, ((0, pad), (0, 0)))
        b = jnp.pad(b, ((0, pad), (0, 0)))
        y = jnp.pad(y, ((0, pad), (0, 0)))

    kernel = functools.partial(
        _disc_loss_kernel,
        inv_batch=1.0 / float(batch),
        half_lambda=0.5 * float(lambda_dis),
        batch=batch,
        tile_rows=tile_rows)

    partials = pl.pallas_call(
        kernel,
        grid=(num_tiles,),
        in_specs=[
            pl.BlockSpec((tile_rows, emd_size), lambda t: (t, 0)),
            pl.BlockSpec((tile_rows, emd_size), lambda t: (t, 0)),
            pl.BlockSpec((tile_rows, 1), lambda t: (t, 0)),
            pl.BlockSpec((tile_rows, 1), lambda t: (t, 0)),
        ],
        out_specs=pl.BlockSpec((1, 128), lambda t: (t, 0)),
        out_shape=jax.ShapeDtypeStruct((num_tiles, 128), jnp.float32),
        compiler_params=pltpu.CompilerParams(
            dimension_semantics=("parallel",)),
    )(u, v, b, y)

    # tiny XLA epilogue: sum per-tile partials (column 0 of each lane-dense row)
    return jnp.sum(partials[:, 0])


def _reference_loss(node_emd, bias_vector, node_ids, neighbor_ids, label, lambda_dis):
    u = node_emd[node_ids]
    v = node_emd[neighbor_ids]
    b = bias_vector[neighbor_ids]
    s = jnp.sum(u * v, axis=1) + b
    bce = jnp.mean(jnp.maximum(s, 0.0) - s * label + jnp.log(1.0 + jnp.exp(-jnp.abs(s))))
    l2 = 0.5 * (jnp.sum(u * u) + jnp.sum(v * v) + jnp.sum(b * b))
    return bce + lambda_dis * l2


if __name__ == "__main__":
    key = jax.random.PRNGKey(0)
    k_emb, k_bias, k_nid, k_mid, k_lbl = jax.random.split(key, 5)

    n_node, emd_size, batch = 32, 32, 8
    lambda_dis = 1e-5

    # deterministic synthetic parameters (node_emd_init shape -> (n_node, emd_size))
    node_emd_init = jax.random.normal(k_emb, (n_node, emd_size), dtype=jnp.float32) * 0.1
    # module initializes bias to zeros; use small random values to exercise the bias path
    bias_vector = jax.random.normal(k_bias, (n_node,), dtype=jnp.float32) * 0.05

    node_ids = jax.random.randint(k_nid, (batch,), 0, n_node, dtype=jnp.int32)
    neighbor_ids = jax.random.randint(k_mid, (batch,), 0, n_node, dtype=jnp.int32)
    label = jax.random.bernoulli(k_lbl, 0.5, (batch,)).astype(jnp.float32)

    loss = discriminator_loss(node_emd_init, bias_vector, node_ids, neighbor_ids,
                              label, lambda_dis=lambda_dis)
    loss = jax.block_until_ready(loss)
    ref = _reference_loss(node_emd_init, bias_vector, node_ids, neighbor_ids,
                          label, lambda_dis)
    assert jnp.allclose(loss, ref, rtol=1e-5, atol=1e-5), (loss, ref)

    # second case: multiple batch tiles + ragged last tile (exercises padding mask)
    batch2 = 21
    node_ids2 = jax.random.randint(k_nid, (batch2,), 0, n_node, dtype=jnp.int32)
    neighbor_ids2 = jax.random.randint(k_mid, (batch2,), 0, n_node, dtype=jnp.int32)
    label2 = jax.random.bernoulli(k_lbl, 0.5, (batch2,)).astype(jnp.float32)

    loss2 = discriminator_loss(node_emd_init, bias_vector, node_ids2, neighbor_ids2,
                               label2, lambda_dis=lambda_dis, max_rows_per_tile=8)
    loss2 = jax.block_until_ready(loss2)
    ref2 = _reference_loss(node_emd_init, bias_vector, node_ids2, neighbor_ids2,
                           label2, lambda_dis)
    assert jnp.allclose(loss2, ref2, rtol=1e-5, atol=1e-5), (loss2, ref2)

    print("KERNEL_OK")
</pallas_src>

<mosaic_0001>
module attributes {stable_mosaic.version = 11 : i64} {
  func.func @_disc_loss_kernel(%arg0: i32, %arg1: memref<8x32xf32, #tpu.memory_space<vmem>>, %arg2: memref<8x32xf32, #tpu.memory_space<vmem>>, %arg3: memref<8x1xf32, #tpu.memory_space<vmem>>, %arg4: memref<8x1xf32, #tpu.memory_space<vmem>>, %arg5: memref<1x128xf32, #tpu.memory_space<vmem>>) attributes {dimension_semantics = [#tpu.dimension_semantics<parallel>], iteration_bounds = array<i64: 1>, scalar_prefetch = 0 : i64, scratch_operands = 0 : i64, tpu.core_type = #tpu.core_type<tc>, window_params = [{transform_indices = @transform_0, window_bounds = array<i64: 8, 32>}, {transform_indices = @transform_1, window_bounds = array<i64: 8, 32>}, {transform_indices = @transform_2, window_bounds = array<i64: 8, 1>}, {transform_indices = @transform_3, window_bounds = array<i64: 8, 1>}, {transform_indices = @transform_4, window_bounds = array<i64: 1, 128>}]} {
    %c0 = arith.constant 0 : index
    %c0_0 = arith.constant 0 : index
    %0 = vector.load %arg1[%c0, %c0_0] : memref<8x32xf32, #tpu.memory_space<vmem>>, vector<8x32xf32>
    %c0_1 = arith.constant 0 : index
    %c0_2 = arith.constant 0 : index
    %1 = vector.load %arg2[%c0_1, %c0_2] : memref<8x32xf32, #tpu.memory_space<vmem>>, vector<8x32xf32>
    %c0_3 = arith.constant 0 : index
    %c0_4 = arith.constant 0 : index
    %2 = vector.load %arg3[%c0_3, %c0_4] : memref<8x1xf32, #tpu.memory_space<vmem>>, vector<8x1xf32>
    %c0_5 = arith.constant 0 : index
    %c0_6 = arith.constant 0 : index
    %3 = vector.load %arg4[%c0_5, %c0_6] : memref<8x1xf32, #tpu.memory_space<vmem>>, vector<8x1xf32>
    %4 = arith.mulf %0, %1 : vector<8x32xf32>
    %cst = arith.constant dense<0.000000e+00> : vector<8xf32>
    %5 = vector.multi_reduction <add>, %4, %cst [1] : vector<8x32xf32> to vector<8xf32>
    %6 = vector.shape_cast %5 : vector<8xf32> to vector<8x1xf32>
    %7 = arith.addf %6, %2 : vector<8x1xf32>
    %cst_7 = arith.constant 0.000000e+00 : f32
    %8 = vector.broadcast %cst_7 : f32 to vector<8x1xf32>
    %9 = arith.maximumf %7, %8 : vector<8x1xf32>
    %10 = arith.mulf %7, %3 : vector<8x1xf32>
    %11 = arith.subf %9, %10 : vector<8x1xf32>
    %12 = math.absf %7 : vector<8x1xf32>
    %cst_8 = arith.constant 0.000000e+00 : f32
    %13 = vector.broadcast %cst_8 : f32 to vector<8x1xf32>
    %14 = arith.subf %13, %12 : vector<8x1xf32>
    %15 = math.exp %14 : vector<8x1xf32>
    %cst_9 = arith.constant 1.000000e+00 : f32
    %16 = vector.broadcast %cst_9 : f32 to vector<8x1xf32>
    %17 = arith.addf %16, %15 : vector<8x1xf32>
    %18 = math.log %17 : vector<8x1xf32>
    %19 = arith.addf %11, %18 : vector<8x1xf32>
    %20 = tpu.iota {dimensions = array<i32: 0>} : vector<8x1xi32>
    %c8_i32 = arith.constant 8 : i32
    %21 = arith.muli %arg0, %c8_i32 : i32
    %22 = vector.broadcast %21 : i32 to vector<8x1xi32>
    %23 = arith.addi %20, %22 : vector<8x1xi32>
    %c8_i32_10 = arith.constant 8 : i32
    %24 = vector.broadcast %c8_i32_10 : i32 to vector<8x1xi32>
    %25 = arith.cmpi slt, %23, %24 : vector<8x1xi32>
    %cst_11 = arith.constant 0.000000e+00 : f32
    %26 = vector.broadcast %cst_11 : f32 to vector<8x1xf32>
    %27 = arith.select %25, %19, %26 : vector<8x1xi1>, vector<8x1xf32>
    %28 = arith.mulf %0, %0 : vector<8x32xf32>
    %29 = arith.mulf %1, %1 : vector<8x32xf32>
    %30 = arith.addf %28, %29 : vector<8x32xf32>
    %cst_12 = arith.constant dense<0.000000e+00> : vector<8xf32>
    %31 = vector.multi_reduction <add>, %30, %cst_12 [1] : vector<8x32xf32> to vector<8xf32>
    %32 = vector.shape_cast %31 : vector<8xf32> to vector<8x1xf32>
    %33 = arith.mulf %2, %2 : vector<8x1xf32>
    %34 = arith.addf %32, %33 : vector<8x1xf32>
    %cst_13 = arith.constant 1.250000e-01 : f32
    %35 = vector.broadcast %cst_13 : f32 to vector<8x1xf32>
    %36 = arith.mulf %27, %35 : vector<8x1xf32>
    %cst_14 = arith.constant 5.000000e-06 : f32
    %37 = vector.broadcast %cst_14 : f32 to vector<8x1xf32>
    %38 = arith.mulf %37, %34 : vector<8x1xf32>
    %39 = arith.addf %36, %38 : vector<8x1xf32>
    %40 = vector.shape_cast %39 : vector<8x1xf32> to vector<1x8x1xf32>
    %cst_15 = arith.constant dense<0.000000e+00> : vector<1xf32>
    %41 = vector.multi_reduction <add>, %40, %cst_15 [1, 2] : vector<1x8x1xf32> to vector<1xf32>
    %42 = vector.shape_cast %41 : vector<1xf32> to vector<1x1x1xf32>
    %43 = vector.extract %42[0, 0, 0] : f32 from vector<1x1x1xf32>
    %44 = vector.broadcast %43 : f32 to vector<1x128xf32>
    %c0_16 = arith.constant 0 : index
    %c0_17 = arith.constant 0 : index
    %45 = vector.load %arg5[%c0_16, %c0_17] : memref<1x128xf32, #tpu.memory_space<vmem>>, vector<1x128xf32>
    tpu.vector_store %arg5[%c0_16, %c0_17], %44 {strides = array<i32>} : memref<1x128xf32, #tpu.memory_space<vmem>>, vector<1x128xf32>,
    return
  }
  func.func @transform_0(%arg0: i32) -> (i32, i32) {
    %c0_i32 = arith.constant 0 : i32
    %c0_i32_0 = arith.constant 0 : i32
    return %arg0, %c0_i32 : i32, i32
  }
  func.func @transform_1(%arg0: i32) -> (i32, i32) {
    %c0_i32 = arith.constant 0 : i32
    %c0_i32_0 = arith.constant 0 : i32
    return %arg0, %c0_i32 : i32, i32
  }
  func.func @transform_2(%arg0: i32) -> (i32, i32) {
    %c0_i32 = arith.constant 0 : i32
    %c0_i32_0 = arith.constant 0 : i32
    return %arg0, %c0_i32 : i32, i32
  }
  func.func @transform_3(%arg0: i32) -> (i32, i32) {
    %c0_i32 = arith.constant 0 : i32
    %c0_i32_0 = arith.constant 0 : i32
    return %arg0, %c0_i32 : i32, i32
  }
  func.func @transform_4(%arg0: i32) -> (i32, i32) {
    %c0_i32 = arith.constant 0 : i32
    %c0_i32_0 = arith.constant 0 : i32
    return %arg0, %c0_i32 : i32, i32
  }
}

</mosaic_0001>

<llo_original>
// kernel: tpu_custom_call.1
$region0: #{tpu_custom_call.1}
  #allocation0 [shape = 'u32[]', space=smem, size = 0x4, offset = 0x4, fixed_abs, tag = 'smem constant byte address 0x4 - core index']
  #allocation1 [shape = 'u32[72,128]{1,0:T(1,128)}', space=vmem, size = 0x9000, scoped, tag = 'internal scratch']
  %s0 = inlined_call_operand.vmem [shape: f32[8,32], index: 0, kind: input, shape index: {}]
  %s1 = inlined_call_operand.vmem [shape: f32[8,32], index: 1, kind: input, shape index: {}]
  %s2 = inlined_call_operand.vmem [shape: f32[8,1], index: 2, kind: input, shape index: {}]
  %s3 = inlined_call_operand.vmem [shape: f32[8,1], index: 3, kind: input, shape index: {}]
  %s4 = inlined_call_operand.hbm [shape: f32[1,128], index: 4, kind: output, shape index: {}]
  %s5 = sld [smem:[#allocation0]]
  $region26: #{tpu_custom_call.1} parent=0
    _
  %s7 = ssub.s32 1, %s5
  %s8 = scalar_select 0, %s7, %s5
  $region1: #{tpu_custom_call.1} parent=0
    #allocation2 [shape = 'u8[512]{0}', space=vmem, size = 0x400, scoped, tag = 'output window, operand 0, single buffered']
    #allocation3 [shape = 's32[1]{0}', space=sflag, size = 0x4, scoped, tag = 'scoped memory for tpu_custom_call.1']
    %9 = vsyncpa [#allocation3], 0
    // Predicated region
    $region2: #{tpu_custom_call.1} parent=1 // pred_check
      _
    $region3: #{tpu_custom_call.1} parent=1 // pred_check_branch
      %11 = sbr.rel (0) target = $region5
    $region4: #{tpu_custom_call.1} parent=1 // pred_region
      _
    $region5: #{tpu_custom_call.1} parent=1 // pred_fallthru
      _
    // Predicated region
    $region6: #{tpu_custom_call.1} parent=1 // pred_check
      _
    $region7: #{tpu_custom_call.1} parent=1 // pred_check_branch
      %13 = sbr.rel (0) target = $region9
    $region8: #{tpu_custom_call.1} parent=1 // pred_region
      _
    $region9: #{tpu_custom_call.1} parent=1 // pred_fallthru
      _
    // Predicated region
    $region10: #{tpu_custom_call.1} parent=1 // pred_check
      _
    $region11: #{tpu_custom_call.1} parent=1 // pred_check_branch
      %15 = sbr.rel (0) target = $region13
    $region12: #{tpu_custom_call.1} parent=1 // pred_region
      _
    $region13: #{tpu_custom_call.1} parent=1 // pred_fallthru
      _
    // Predicated region
    $region14: #{tpu_custom_call.1} parent=1 // pred_check
      _
    $region15: #{tpu_custom_call.1} parent=1 // pred_check_branch
      %17 = sbr.rel (0) target = $region17
    $region16: #{tpu_custom_call.1} parent=1 // pred_region
      _
    $region17: #{tpu_custom_call.1} parent=1 // pred_fallthru
      _
    %v18 = vld [vmem:[%s0] sm:$0xff]
    %v19 = vld [vmem:[%s1] sm:$0xff]
    %v20 = vld [vmem:[%s2] sm:$0xff]
    %v21 = vld [vmem:[%s3] sm:$0xff]
    %v22 = vmul.f32 %v18, %v19
    %vm23 = vcmask 261120
    %v24 = vsel %vm23, %v22, 0.0
    %25 = vadd.xlane.f32.xlu0 %v24
    %v26 = vpop.xlane.xlu0 %25
    %v27 = vadd.f32 %v26, %v20
    %v28 = vmax.f32 %v27, 0.0
    %v29 = vmul.f32 %v27, %v21
    %v30 = vsub.f32 %v28, %v29
    %v31 = vand.u32 2147483647, %v27
    %v32 = vsub.f32 0.0, %v31
    %v33 = vmul.f32 %v32, 1.442695
    %v34 = vpow.pop %v33
    %v35 = vadd.f32 %v34, 1.0
    %v36 = vlog2.pop %v35
    %v37 = vmul.f32 %v36, 0.6931472
    %v38 = vadd.f32 %v30, %v37
    %v39 = vlaneseq
    %v40 = vshrl.u32 %v39, 7
    %s41 = smul.u32 0, 8
    %v42 = vstv %s41
    %v43 = vadd.s32 %v40, %v42
    %vm44 = vcmp.lt.s32.totalorder %v43, 8
    %v45 = vsel %vm44, %v38, 0.0
    %v46 = vmul.f32 %v18, %v18
    %v47 = vmul.f32 %v19, %v19
    %v48 = vadd.f32 %v46, %v47
    %v49 = vsel %vm23, %v48, 0.0
    %50 = vadd.xlane.f32.xlu0 %v49
    %v51 = vpop.xlane.xlu0 %50
    %v52 = vmul.f32 %v20, %v20
    %v53 = vadd.f32 %v51, %v52
    %v54 = vmul.f32 %v45, 0.125
    %v55 = vmul.f32 %v53, 5e-06
    %v56 = vadd.f32 %v54, %v55
    %vm57 = vcmask 7168
    %v58 = vsel %vm57, %v56, 0.0
    %59 = vadd.xlane.f32.xlu0 %v58
    %v60 = vpop.xlane.xlu0 %59
    %v61 = vrot.slane %v60, 4
    %v62 = vadd.f32 %v60, %v61
    %v63 = vrot.slane %v62, 2
    %v64 = vadd.f32 %v62, %v63
    %v65 = vrot.slane %v64, 1
    %v66 = vadd.f32 %v64, %v65
    %s67 = vtos %v66
    %v68 = vstv %s67
    %69 = vst [vmem:[#allocation2] sm:$0x1] %v68
    // Predicated region
    $region18: #{tpu_custom_call.1} parent=1 // pred_check
      _
    $region19: #{tpu_custom_call.1} parent=1 // pred_check_branch
      %71 = sbr.rel (0) target = $region21
    $region20: #{tpu_custom_call.1} parent=1 // pred_region
      %73 = vsyncadd [#allocation3], 0
      %s75 = sshll.u32 [#allocation2], 4
      %s76 = int_to_ptr.vmem [resolvable:$true] %s75
      %s77 = sshll.u32 %s4, 4
      %s78 = int_to_ptr.hbm [resolvable:$true] %s77
      %80 = dma.vmem_to_hbm [thread:$0]  %s76, 16, %s78, [#allocation3]
    $region21: #{tpu_custom_call.1} parent=1 // pred_fallthru
      _
    // Predicated region
    $region22: #{tpu_custom_call.1} parent=1 // pred_check
      _
    $region23: #{tpu_custom_call.1} parent=1 // pred_check_branch
      %82 = sbr.rel (0) target = $region25
    $region24: #{tpu_custom_call.1} parent=1 // pred_region
      %84 = dma.done [#allocation3], 16
    $region25: #{tpu_custom_call.1} parent=1 // pred_fallthru
      _
    %85 = vsyncpa [#allocation3], 1

</llo_original>
